<compile_context>
chip_gen: v5e
topology: v5e:2x2
jax: 0.10.0
libtpu: 0.0.40
codegen_flags: <defaults>
</compile_context>

<pallas_src>
import jax
import jax.numpy as jnp
from jax.experimental import pallas as pl
from jax.experimental.pallas import tpu as pltpu


# ----------------------------- helpers ---------------------------------------


def _layer_norm(v, gamma, beta, eps=1e-5):
    mean = jnp.mean(v, axis=-1, keepdims=True)
    var = jnp.mean((v - mean) ** 2, axis=-1, keepdims=True)
    return (v - mean) * jax.lax.rsqrt(var + eps) * gamma + beta


def _fit_tile(total, preferred, quantum):
    """Largest tile <= preferred that divides `total` and is a multiple of
    `quantum`; falls back to the full extent when it can't be tiled."""
    if total <= preferred or total % quantum:
        return total
    t = (min(preferred, total) // quantum) * quantum
    while total % t:
        t -= quantum
    return t


def _vmem_limit_bytes():
    # ~96 MiB on v5e/v6e (128 MiB physical), ~48 MiB on v7x (64 MiB physical).
    try:
        return int(pltpu.get_tpu_info().vmem_capacity_bytes * 3 // 4)
    except Exception:
        return 48 * 1024 * 1024


# ----------------------------- kernel A: fused QKV projection ----------------


def qkv_proj_kernel(x_ref, w_ref, b_ref, o_ref):
    # (TM, D) @ (D, TN) lane-dense matmul; scale already folded into Wq/bq.
    o_ref[0] = (jnp.dot(x_ref[0], w_ref[...], preferred_element_type=jnp.float32)
                + b_ref[...]).astype(o_ref.dtype)


# ----------------------------- kernel B: flash attention ---------------------


def flash_attn_kernel(lens_ref, q_ref, k_ref, v_ref, o_ref, m_s, l_s, acc_s):
    blk_k = k_ref.shape[2]
    b = pl.program_id(0)
    kv = pl.program_id(2)
    seq_len = lens_ref[b]
    cdt = q_ref.dtype

    @pl.when(kv == 0)
    def _():
        m_s[...] = jnp.full_like(m_s, -1e30)
        l_s[...] = jnp.zeros_like(l_s)
        acc_s[...] = jnp.zeros_like(acc_s)

    # Skip compute for fully padded kv tiles (their DMA is also skipped via the
    # clamped index_map in the wrapper).
    @pl.when(kv * blk_k < seq_len)
    def _():
        q = q_ref[0]                               # (H, TQ, dk), pre-scaled
        k = k_ref[0]                               # (H, TK, dk)
        v = v_ref[0]                               # (H, TK, dk)
        s = jnp.einsum("hqc,hkc->hqk", q, k,
                       preferred_element_type=jnp.float32)           # (H, TQ, TK)
        key_pos = kv * blk_k + jax.lax.broadcasted_iota(jnp.int32, (1, 1, blk_k), 2)
        valid = key_pos < seq_len
        s = jnp.where(valid, s, -1e30)

        m_prev = m_s[...]
        m_new = jnp.maximum(m_prev, jnp.max(s, axis=-1, keepdims=True))
        alpha = jnp.exp(m_prev - m_new)
        p = jnp.exp(s - m_new)
        p = jnp.where(valid, p, 0.0)               # robust key-padding mask
        l_s[...] = alpha * l_s[...] + jnp.sum(p, axis=-1, keepdims=True)
        acc_s[...] = alpha * acc_s[...] + jnp.einsum(
            "hqk,hkc->hqc", p.astype(cdt), v, preferred_element_type=jnp.float32)
        m_s[...] = m_new

    @pl.when(kv == pl.num_programs(2) - 1)
    def _():
        denom = jnp.maximum(l_s[...], 1e-20)       # guard fully padded rows
        o_ref[0] = (acc_s[...] / denom).astype(o_ref.dtype)


# ------------------ kernel C: o-projection + LN1 + FFN + LN2 -----------------


def out_ffn_kernel(x_ref, ctx_ref, wo_ref, bo_ref, ln1_g_ref, ln1_b_ref,
                   w1_ref, b1_ref, w2_ref, b2_ref, ln2_g_ref, ln2_b_ref,
                   o_ref, h1_s, acc_s):
    f = pl.program_id(2)
    cdt = x_ref.dtype

    @pl.when(f == 0)
    def _():
        # Single lane-dense (TM, D) @ (D, D) output projection (K = D).
        attn = (jnp.dot(ctx_ref[0], wo_ref[...], preferred_element_type=jnp.float32)
                + bo_ref[...].astype(jnp.float32))
        h1_s[...] = _layer_norm(x_ref[0].astype(jnp.float32) + attn,
                                ln1_g_ref[...].astype(jnp.float32),
                                ln1_b_ref[...].astype(jnp.float32))
        acc_s[...] = jnp.zeros_like(acc_s)

    # One streamed FFN slab per grid step: (TM, D)@(D, TF) -> ReLU -> (TM, TF)@(TF, D).
    z = (jnp.dot(h1_s[...].astype(cdt), w1_ref[...], preferred_element_type=jnp.float32)
         + b1_ref[...].astype(jnp.float32))
    z = jnp.maximum(z, 0.0).astype(cdt)
    acc_s[...] += jnp.dot(z, w2_ref[...], preferred_element_type=jnp.float32)

    @pl.when(f == pl.num_programs(2) - 1)
    def _():
        ff = acc_s[...] + b2_ref[...].astype(jnp.float32)
        o_ref[0] = _layer_norm(h1_s[...] + ff,
                               ln2_g_ref[...].astype(jnp.float32),
                               ln2_b_ref[...].astype(jnp.float32)).astype(o_ref.dtype)


# ----------------------------- wrapper ---------------------------------------


def encoder_layer(x, params, num_heads, seq_lens=None, *,
                  block_m=None, block_q=None, block_k=None,
                  block_f=None, block_n=None):
    B, S, D = x.shape
    F = params["w1"].shape[1]
    H = num_heads
    assert D % H == 0, "d_model must be divisible by num_heads"
    dk = D // H
    cdt = x.dtype
    itemsize = x.dtype.itemsize

    block_m = block_m or _fit_tile(S, 256, 8)
    block_q = block_q or _fit_tile(S, 256, 8)
    block_k = block_k or _fit_tile(S, 256, 8)
    block_f = block_f or _fit_tile(F, 512, 128)
    block_n = block_n or _fit_tile(3 * D, 512, 128)
    assert S % block_m == 0 and S % block_q == 0 and S % block_k == 0
    assert F % block_f == 0 and (3 * D) % block_n == 0

    if seq_lens is None:
        seq_lens = jnp.full((B,), S, jnp.int32)
    seq_lens = jnp.asarray(seq_lens, jnp.int32)

    vmem_limit = _vmem_limit_bytes()
    scale = 1.0 / (dk ** 0.5)

    # ---- fused QKV weights; 1/sqrt(d_k) folded into Q ----
    w_qkv = jnp.concatenate(
        [params["wq"] * scale, params["wk"], params["wv"]], axis=1).astype(cdt)  # (D, 3D)
    b_qkv = jnp.concatenate(
        [params["bq"] * scale, params["bk"], params["bv"]], axis=1)              # (1, 3D)

    # --------------------- kernel A: QKV projection -------------------------
    nm, nn = S // block_m, (3 * D) // block_n
    qkv = pl.pallas_call(
        qkv_proj_kernel,
        out_shape=jax.ShapeDtypeStruct((B, S, 3 * D), cdt),
        grid_spec=pltpu.PrefetchScalarGridSpec(
            num_scalar_prefetch=0,
            grid=(B, nm, nn),
            in_specs=[
                pl.BlockSpec((1, block_m, D), lambda b, m, n: (b, m, 0)),
                pl.BlockSpec((D, block_n), lambda b, m, n: (0, n)),     # streamed
                pl.BlockSpec((1, block_n), lambda b, m, n: (0, n)),
            ],
            out_specs=pl.BlockSpec((1, block_m, block_n), lambda b, m, n: (b, m, n)),
        ),
        compiler_params=pltpu.CompilerParams(
            dimension_semantics=("parallel", "parallel", "arbitrary"),
            vmem_limit_bytes=vmem_limit),
        cost_estimate=pl.CostEstimate(
            flops=int(2 * B * S * D * 3 * D), transcendentals=0,
            bytes_accessed=int((x.size + w_qkv.size + B * S * 3 * D) * itemsize)),
    )(x, w_qkv, b_qkv)

    # ---- wrapper-side layout plumbing: head-major Q/K/V views ----
    def split_heads(a):                      # (B, S, D) -> (B, H, S, dk)
        return a.reshape(B, S, H, dk).transpose(0, 2, 1, 3)

    q_h = split_heads(qkv[..., 0 * D:1 * D])
    k_h = split_heads(qkv[..., 1 * D:2 * D])
    v_h = split_heads(qkv[..., 2 * D:3 * D])

    # --------------------- kernel B: flash attention ------------------------
    nq, nkv = S // block_q, S // block_k

    def q_map(b, qi, kv, lens):
        return (b, 0, qi, 0)

    def kv_map(b, qi, kv, lens):
        # Clamp fully padded kv tiles to the last valid block -> block index
        # does not change -> Pallas skips the redundant HBM->VMEM DMA.
        last = jnp.maximum(pl.cdiv(lens[b], block_k) - 1, 0)
        return (b, 0, jnp.minimum(kv, last), 0)

    ctx = pl.pallas_call(
        flash_attn_kernel,
        out_shape=jax.ShapeDtypeStruct((B, H, S, dk), cdt),
        grid_spec=pltpu.PrefetchScalarGridSpec(
            num_scalar_prefetch=1,
            grid=(B, nq, nkv),
            in_specs=[
                pl.BlockSpec((1, H, block_q, dk), q_map),
                pl.BlockSpec((1, H, block_k, dk), kv_map),
                pl.BlockSpec((1, H, block_k, dk), kv_map),
            ],
            out_specs=pl.BlockSpec((1, H, block_q, dk), q_map),
            scratch_shapes=[
                pltpu.VMEM((H, block_q, 1), jnp.float32),     # running max
                pltpu.VMEM((H, block_q, 1), jnp.float32),     # running sum
                pltpu.VMEM((H, block_q, dk), jnp.float32),    # accumulator
            ]),
        compiler_params=pltpu.CompilerParams(
            dimension_semantics=("parallel", "parallel", "arbitrary"),
            vmem_limit_bytes=vmem_limit),
        cost_estimate=pl.CostEstimate(
            flops=int(4 * B * S * S * D),
            transcendentals=int(B * H * S * S),
            bytes_accessed=int((1 + 2 * nq + 1) * B * S * D * itemsize + B * 4)),
    )(seq_lens, q_h, k_h, v_h)

    # merge heads back to a lane-dense (B, S, D) slab (layout plumbing)
    ctx2d = ctx.transpose(0, 2, 1, 3).reshape(B, S, D)

    # -------------- kernel C: o-proj + LN1 + streamed FFN + LN2 -------------
    nf = F // block_f
    out = pl.pallas_call(
        out_ffn_kernel,
        out_shape=jax.ShapeDtypeStruct((B, S, D), cdt),
        grid_spec=pltpu.PrefetchScalarGridSpec(
            num_scalar_prefetch=0,
            grid=(B, nm, nf),
            in_specs=[
                pl.BlockSpec((1, block_m, D), lambda b, m, f: (b, m, 0)),   # x (residual)
                pl.BlockSpec((1, block_m, D), lambda b, m, f: (b, m, 0)),   # ctx (merged heads)
                pl.BlockSpec((D, D), lambda b, m, f: (0, 0)),               # wo (resident)
                pl.BlockSpec((1, D), lambda b, m, f: (0, 0)),               # bo
                pl.BlockSpec((1, D), lambda b, m, f: (0, 0)),               # ln1 gamma
                pl.BlockSpec((1, D), lambda b, m, f: (0, 0)),               # ln1 beta
                pl.BlockSpec((D, block_f), lambda b, m, f: (0, f)),         # w1 slab (streamed)
                pl.BlockSpec((1, block_f), lambda b, m, f: (0, f)),         # b1 slab
                pl.BlockSpec((block_f, D), lambda b, m, f: (f, 0)),         # w2 slab (streamed)
                pl.BlockSpec((1, D), lambda b, m, f: (0, 0)),               # b2
                pl.BlockSpec((1, D), lambda b, m, f: (0, 0)),               # ln2 gamma
                pl.BlockSpec((1, D), lambda b, m, f: (0, 0)),               # ln2 beta
            ],
            out_specs=pl.BlockSpec((1, block_m, D), lambda b, m, f: (b, m, 0)),
            scratch_shapes=[
                pltpu.VMEM((block_m, D), jnp.float32),   # h1 (post-LN1)
                pltpu.VMEM((block_m, D), jnp.float32),   # FFN accumulator
            ]),
        compiler_params=pltpu.CompilerParams(
            dimension_semantics=("parallel", "parallel", "arbitrary"),
            vmem_limit_bytes=vmem_limit),
        cost_estimate=pl.CostEstimate(
            flops=int(2 * B * S * D * (D + 2 * F)), transcendentals=0,
            bytes_accessed=int((3 * B * S * D + D * D + 2 * D * F) * itemsize)),
    )(x, ctx2d,
      params["wo"].astype(cdt), params["bo"],
      params["ln1_g"], params["ln1_b"],
      params["w1"].astype(cdt), params["b1"],
      params["w2"].astype(cdt), params["b2"],
      params["ln2_g"], params["ln2_b"])
    return out


# ----------------------------- reference (pure JAX) ---------------------------


def encoder_layer_ref(x, params, num_heads, seq_lens=None):
    B, S, D = x.shape
    dk = D // num_heads
    if seq_lens is None:
        seq_lens = jnp.full((B,), S, jnp.int32)
    key_valid = jnp.arange(S)[None, :] < seq_lens[:, None]       # (B, S)

    def ln(v, g, b, eps=1e-5):
        m = v.mean(-1, keepdims=True)
        var = ((v - m) ** 2).mean(-1, keepdims=True)
        return (v - m) / jnp.sqrt(var + eps) * g + b

    q = x @ params["wq"] + params["bq"]
    k = x @ params["wk"] + params["bk"]
    v = x @ params["wv"] + params["bv"]
    q = q.reshape(B, S, num_heads, dk).transpose(0, 2, 1, 3)
    k = k.reshape(B, S, num_heads, dk).transpose(0, 2, 1, 3)
    v = v.reshape(B, S, num_heads, dk).transpose(0, 2, 1, 3)
    s = jnp.einsum("bhqd,bhkd->bhqk", q, k) / (dk ** 0.5)
    s = jnp.where(key_valid[:, None, None, :], s, -1e9)
    p = jax.nn.softmax(s, axis=-1)
    ctx = jnp.einsum("bhqk,bhkd->bhqd", p, v).transpose(0, 2, 1, 3).reshape(B, S, D)
    attn = ctx @ params["wo"] + params["bo"]
    h1 = ln(x + attn, params["ln1_g"], params["ln1_b"])
    ff = jnp.maximum(h1 @ params["w1"] + params["b1"], 0.0) @ params["w2"] + params["b2"]
    return ln(h1 + ff, params["ln2_g"], params["ln2_b"])


# ----------------------------- main -------------------------------------------


if __name__ == "__main__":
    B, S, D = 2, 16, 128          # lane-dense hidden dim (multiple of 128)
    NUM_HEADS = 4                 # d_k = 32
    F = 4 * D                     # feed-forward hidden dim = 512

    key = jax.random.PRNGKey(0)
    ks = jax.random.split(key, 17)
    init = lambda k, shape: jax.random.normal(k, shape, jnp.float32) * 0.02

    params = {
        "wq": init(ks[0], (D, D)), "bq": init(ks[1], (1, D)),
        "wk": init(ks[2], (D, D)), "bk": init(ks[3], (1, D)),
        "wv": init(ks[4], (D, D)), "bv": init(ks[5], (1, D)),
        "wo": init(ks[6], (D, D)), "bo": init(ks[7], (1, D)),
        "ln1_g": 1.0 + init(ks[8], (1, D)), "ln1_b": init(ks[9], (1, D)),
        "w1": init(ks[10], (D, F)), "b1": init(ks[11], (1, F)),
        "w2": init(ks[12], (F, D)), "b2": init(ks[13], (1, D)),
        "ln2_g": 1.0 + init(ks[14], (1, D)), "ln2_b": init(ks[15], (1, D)),
    }

    x = jax.random.normal(ks[16], (B, S, D), jnp.float32)
    # lengths exercise both in-tile key masking (13) and whole-tile skipping (8)
    seq_lens = jnp.array([13, 8], jnp.int32)

    out = encoder_layer(x, params, NUM_HEADS, seq_lens=seq_lens,
                        block_m=8, block_q=8, block_k=8,
                        block_f=256, block_n=128)
    out = jax.block_until_ready(out)

    ref = encoder_layer_ref(x, params, NUM_HEADS, seq_lens=seq_lens)
    assert out.shape == (B, S, D)
    assert jnp.allclose(out, ref, atol=5e-3, rtol=5e-3), (
        "mismatch vs JAX reference: max|diff|="
        + str(float(jnp.max(jnp.abs(out - ref)))))

    print("KERNEL_OK")
</pallas_src>

<mosaic_0001>
module attributes {stable_mosaic.version = 11 : i64} {
  func.func @qkv_proj_kernel(%arg0: i32, %arg1: i32, %arg2: i32, %arg3: memref<1x8x128xf32, #tpu.memory_space<vmem>>, %arg4: memref<128x128xf32, #tpu.memory_space<vmem>>, %arg5: memref<1x128xf32, #tpu.memory_space<vmem>>, %arg6: memref<1x8x128xf32, #tpu.memory_space<vmem>>) attributes {dimension_semantics = [#tpu.dimension_semantics<parallel>, #tpu.dimension_semantics<parallel>, #tpu.dimension_semantics<arbitrary>], iteration_bounds = array<i64: 2, 2, 3>, scalar_prefetch = 0 : i64, scratch_operands = 0 : i64, tpu.core_type = #tpu.core_type<tc>, window_params = [{transform_indices = @transform_0, window_bounds = array<i64: 1, 8, 128>}, {transform_indices = @transform_1, window_bounds = array<i64: 128, 128>}, {transform_indices = @transform_2, window_bounds = array<i64: 1, 128>}, {transform_indices = @transform_3, window_bounds = array<i64: 1, 8, 128>}]} {
    %c0 = arith.constant 0 : index
    %c0_0 = arith.constant 0 : index
    %c0_1 = arith.constant 0 : index
    %0 = vector.load %arg3[%c0, %c0_0, %c0_1] : memref<1x8x128xf32, #tpu.memory_space<vmem>>, vector<1x8x128xf32>
    %1 = vector.shape_cast %0 : vector<1x8x128xf32> to vector<8x128xf32>
    %c0_2 = arith.constant 0 : index
    %c0_3 = arith.constant 0 : index
    %2 = vector.load %arg4[%c0_2, %c0_3] : memref<128x128xf32, #tpu.memory_space<vmem>>, vector<128x128xf32>
    %cst = arith.constant dense<0.000000e+00> : vector<8x128xf32>
    %3 = tpu.matmul %1, %2, %cst {dimension_numbers = #tpu.dot_dimension_numbers<[1], [0], [0], [1], [0, 0, 1, 1], [], []>} : vector<8x128xf32>, vector<128x128xf32>, vector<8x128xf32> -> vector<8x128xf32>
    %c0_4 = arith.constant 0 : index
    %c0_5 = arith.constant 0 : index
    %4 = vector.load %arg5[%c0_4, %c0_5] : memref<1x128xf32, #tpu.memory_space<vmem>>, vector<1x128xf32>
    %5 = vector.broadcast %4 : vector<1x128xf32> to vector<8x128xf32>
    %6 = arith.addf %3, %5 : vector<8x128xf32>
    %c0_6 = arith.constant 0 : index
    %c0_7 = arith.constant 0 : index
    %c0_8 = arith.constant 0 : index
    %7 = vector.load %arg6[%c0_6, %c0_7, %c0_8] : memref<1x8x128xf32, #tpu.memory_space<vmem>>, vector<1x8x128xf32>
    %8 = vector.shape_cast %7 : vector<1x8x128xf32> to vector<8x128xf32>
    %9 = vector.shape_cast %6 : vector<8x128xf32> to vector<1x8x128xf32>
    tpu.vector_store %arg6[%c0_6, %c0_7, %c0_8], %9 {strides = array<i32>} : memref<1x8x128xf32, #tpu.memory_space<vmem>>, vector<1x8x128xf32>,
    return
  }
  func.func @transform_0(%arg0: i32, %arg1: i32, %arg2: i32) -> (i32, i32, i32) {
    %c0_i32 = arith.constant 0 : i32
    %c0_i32_0 = arith.constant 0 : i32
    return %arg0, %arg1, %c0_i32 : i32, i32, i32
  }
  func.func @transform_1(%arg0: i32, %arg1: i32, %arg2: i32) -> (i32, i32) {
    %c0_i32 = arith.constant 0 : i32
    %c0_i32_0 = arith.constant 0 : i32
    return %c0_i32, %arg2 : i32, i32
  }
  func.func @transform_2(%arg0: i32, %arg1: i32, %arg2: i32) -> (i32, i32) {
    %c0_i32 = arith.constant 0 : i32
    %c0_i32_0 = arith.constant 0 : i32
    return %c0_i32, %arg2 : i32, i32
  }
  func.func @transform_3(%arg0: i32, %arg1: i32, %arg2: i32) -> (i32, i32, i32) {
    %c0_i32 = arith.constant 0 : i32
    return %arg0, %arg1, %arg2 : i32, i32, i32
  }
}

</mosaic_0001>

<llo_original>
// kernel: tpu_custom_call.1
$region0: #{tpu_custom_call.1}
  #allocation0 [shape = 'u32[]', space=smem, size = 0x4, offset = 0x4, fixed_abs, tag = 'smem constant byte address 0x4 - core index']
  #allocation1 [shape = 'u32[72,128]{1,0:T(1,128)}', space=vmem, size = 0x9000, scoped, tag = 'internal scratch']
  %s0 = inlined_call_operand.hbm [shape: f32[2,16,128], index: 0, kind: input, shape index: {}]
  %s1 = inlined_call_operand.hbm [shape: f32[128,384], index: 1, kind: input, shape index: {}]
  %s2 = inlined_call_operand.hbm [shape: f32[1,384], index: 2, kind: input, shape index: {}]
  %s3 = inlined_call_operand.hbm [shape: f32[2,16,384], index: 3, kind: output, shape index: {}]
  %s4 = sld [smem:[#allocation0]]
  $region57: #{tpu_custom_call.1} parent=0
    _
  %s6 = ssub.s32 1, %s4
  %s7 = scalar_select 0, %s6, %s4
  $region1: #{tpu_custom_call.1} parent=0
    #allocation2 [shape = 'u8[8192]{0}', space=vmem, size = 0x2000, scoped, tag = 'input window, operand 0']
    #allocation3 [shape = 's32[2]{0}', space=sflag, size = 0x8, scoped, tag = 'scoped memory for tpu_custom_call.1']
    #allocation4 [shape = 's32[2]{0}', space=sflag, size = 0x8, scoped, tag = 'scoped memory for tpu_custom_call.1']
    #allocation5 [shape = 'u8[131072]{0}', space=vmem, size = 0x20000, scoped, tag = 'input window, operand 1']
    #allocation6 [shape = 's32[2]{0}', space=sflag, size = 0x8, scoped, tag = 'scoped memory for tpu_custom_call.1']
    #allocation7 [shape = 'u8[1024]{0}', space=vmem, size = 0x400, scoped, tag = 'input window, operand 2']
    #allocation8 [shape = 'u8[8192]{0}', space=vmem, size = 0x2000, scoped, tag = 'output window, operand 0']
    %8 = vsyncpa [#allocation3], 0
    %s9 = scalar_lea.sflag [#allocation3], 1
    %10 = vsyncpa %s9, 0
    %11 = vsyncpa [#allocation6], 0
    %s12 = scalar_lea.sflag [#allocation6], 1
    %13 = vsyncpa %s12, 0
    %14 = vsyncpa [#allocation4], 0
    %s15 = scalar_lea.sflag [#allocation4], 1
    %16 = vsyncpa %s15, 0
    loop: start=0, step=1, limit=14
    $region2: #{tpu_custom_call.1} parent=1 // loop_pre_header
      _
    $region3: #{tpu_custom_call.1} parent=1 // loop_header
      %s18 = sphi 0, %s22
      %p19 = scmp.ge.s32.totalorder %s18, 14
      %s25 = sphi 0, %s44
      %s26 = sphi 0, %s40
      %s27 = sphi 0, %s36
      %s28 = sphi 0, %s25
      %s29 = sphi 0, %s26
      %s30 = sphi 0, %s27
      %s31 = sphi 0, %s28
      %s32 = sphi 0, %s29
      %s33 = sphi 0, %s30
      %s49 = sphi 0, %s51
      %s52 = sphi 0, %s49
      %s53 = sphi 0, %s52
      %s69 = sphi 0, %s53
      %s75 = sphi 0, %s77
      %s78 = sphi 0, %s75
      %s79 = sphi 0, %s78
      %s95 = sphi 0, %s79
      %s101 = sphi 0, %s103
      %s104 = sphi 0, %s101
      %s105 = sphi 0, %s104
      %s121 = sphi 0, %s105
      %s131 = sphi 0, %s133
      %s134 = sphi 0, %s131
      %s135 = sphi 0, %s134
      %s151 = sphi 0, %s135
    $region4: #{tpu_custom_call.1} parent=1 // loop_header_branch
      %21 = sbr.rel (%p19) target = $region8
    $region5: #{tpu_custom_call.1} parent=1 // loop_body
      %s23 = ssub.s32 %s18, 1
      %s24 = ssub.s32 %s18, 2
      %s34 = sadd.s32 1, %s27
      %p35 = scmp.ge.s32.totalorder %s34, 3
      %s36 = scalar_select %p35, 0, %s34
      %s37 = sadd.s32 1, %s26
      %s38 = scalar_select %p35, %s37, %s26
      %p39 = scmp.ge.s32.totalorder %s38, 2
      %s40 = scalar_select %p39, 0, %s38
      %s41 = sadd.s32 1, %s25
      %s42 = scalar_select %p39, %s41, %s25
      %p43 = scmp.ge.s32.totalorder %s42, 2
      %s44 = scalar_select %p43, 0, %s42
      %s45 = ssub.s32 %s25, %s44
      %s46 = ssub.s32 %s26, %s40
      %s47 = sor.u32 %s45, %s46
      %p48 = scmp.eq.s32.totalorder %s47, 0
      %s50 = sadd.s32 %s49, 1
      %s51 = scalar_select %p48, %s49, %s50
      %p54 = pneg %p48
      %p55 = scmp.eq.s32.totalorder %s18, 11
      %p56 = por %p54, %p55
      %p57 = scmp.ne.s32.totalorder %s49, %s52
      %p58 = scmp.eq.s32.totalorder %s18, 0
      %p59 = por %p57, %p58
      %p60 = scmp.ne.s32.totalorder %s49, %s52
      %p61 = scmp.eq.s32.totalorder %s23, 11
      %p62 = por %p60, %p61
      %p63 = scmp.ne.s32.totalorder %s52, %s53
      %p64 = scmp.eq.s32.totalorder %s23, 0
      %p65 = por %p63, %p64
      %p66 = scmp.ne.s32.totalorder %s52, %s53
      %p67 = scmp.eq.s32.totalorder %s24, 11
      %p68 = por %p66, %p67
      %p70 = scmp.ne.s32.totalorder %s53, %s69
      %p71 = scmp.eq.s32.totalorder %s24, 0
      %p72 = por %p70, %p71
      %s73 = ssub.s32 %s27, %s36
      %p74 = scmp.eq.s32.totalorder %s73, 0
      %s76 = sadd.s32 %s75, 1
      %s77 = scalar_select %p74, %s75, %s76
      %p80 = pneg %p74
      %p81 = scmp.eq.s32.totalorder %s18, 11
      %p82 = por %p80, %p81
      %p83 = scmp.ne.s32.totalorder %s75, %s78
      %p84 = scmp.eq.s32.totalorder %s18, 0
      %p85 = por %p83, %p84
      %p86 = scmp.ne.s32.totalorder %s75, %s78
      %p87 = scmp.eq.s32.totalorder %s23, 11
      %p88 = por %p86, %p87
      %p89 = scmp.ne.s32.totalorder %s78, %s79
      %p90 = scmp.eq.s32.totalorder %s23, 0
      %p91 = por %p89, %p90
      %p92 = scmp.ne.s32.totalorder %s78, %s79
      %p93 = scmp.eq.s32.totalorder %s24, 11
      %p94 = por %p92, %p93
      %p96 = scmp.ne.s32.totalorder %s79, %s95
      %p97 = scmp.eq.s32.totalorder %s24, 0
      %p98 = por %p96, %p97
      %s99 = ssub.s32 %s27, %s36
      %p100 = scmp.eq.s32.totalorder %s99, 0
      %s102 = sadd.s32 %s101, 1
      %s103 = scalar_select %p100, %s101, %s102
      %p106 = pneg %p100
      %p107 = scmp.eq.s32.totalorder %s18, 11
      %p108 = por %p106, %p107
      %p109 = scmp.ne.s32.totalorder %s101, %s104
      %p110 = scmp.eq.s32.totalorder %s18, 0
      %p111 = por %p109, %p110
      %p112 = scmp.ne.s32.totalorder %s101, %s104
      %p113 = scmp.eq.s32.totalorder %s23, 11
      %p114 = por %p112, %p113
      %p115 = scmp.ne.s32.totalorder %s104, %s105
      %p116 = scmp.eq.s32.totalorder %s23, 0
      %p117 = por %p115, %p116
      %p118 = scmp.ne.s32.totalorder %s104, %s105
      %p119 = scmp.eq.s32.totalorder %s24, 11
      %p120 = por %p118, %p119
      %p122 = scmp.ne.s32.totalorder %s105, %s121
      %p123 = scmp.eq.s32.totalorder %s24, 0
      %p124 = por %p122, %p123
      %s125 = ssub.s32 %s25, %s44
      %s126 = ssub.s32 %s26, %s40
      %s127 = sor.u32 %s125, %s126
      %s128 = ssub.s32 %s27, %s36
      %s129 = sor.u32 %s127, %s128
      %p130 = scmp.eq.s32.totalorder %s129, 0
      %s132 = sadd.s32 %s131, 1
      %s133 = scalar_select %p130, %s131, %s132
      %p136 = pneg %p130
      %p137 = scmp.eq.s32.totalorder %s18, 11
      %p138 = por %p136, %p137
      %p139 = scmp.ne.s32.totalorder %s131, %s134
      %p140 = scmp.eq.s32.totalorder %s18, 0
      %p141 = por %p139, %p140
      %p142 = scmp.ne.s32.totalorder %s131, %s134
      %p143 = scmp.eq.s32.totalorder %s23, 11
      %p144 = por %p142, %p143
      %p145 = scmp.ne.s32.totalorder %s134, %s135
      %p146 = scmp.eq.s32.totalorder %s23, 0
      %p147 = por %p145, %p146
      %p148 = scmp.ne.s32.totalorder %s134, %s135
      %p149 = scmp.eq.s32.totalorder %s24, 11
      %p150 = por %p148, %p149
      %p152 = scmp.ne.s32.totalorder %s135, %s151
      %p153 = scmp.eq.s32.totalorder %s24, 0
      %p154 = por %p152, %p153
      %p155 = scmp.le.s32.totalorder 1, %s18
      %p156 = scmp.lt.s32.totalorder %s18, 13
      %p157 = pnand %p155, %p156
      %p158 = pneg %p157
      // Predicated region
      $region9: #{tpu_custom_call.1} parent=5 // pred_check
        _
      $region10: #{tpu_custom_call.1} parent=5 // pred_check_branch
        %160 = sbr.rel (%p157) target = $region12
      $region11: #{tpu_custom_call.1} parent=5 // pred_region
        %s161 = ssub.s32 %s18, 1
      $region12: #{tpu_custom_call.1} parent=5 // pred_fallthru
        _
      %p162 = scmp.lt.s32.totalorder %s18, 12
      // Predicated region
      $region13: #{tpu_custom_call.1} parent=5 // pred_check
        %p163 = pneg %p162
      $region14: #{tpu_custom_call.1} parent=5 // pred_check_branch
        %165 = sbr.rel (%p163) target = $region16
      $region15: #{tpu_custom_call.1} parent=5 // pred_region
        // Predicated region
        $region17: #{tpu_custom_call.1} parent=15 // pred_check
          %p166 = pneg %p59
        $region18: #{tpu_custom_call.1} parent=15 // pred_check_branch
          %168 = sbr.rel (%p166) target = $region20
        $region19: #{tpu_custom_call.1} parent=15 // pred_region
          %s169 = sand.u32 %s49, 1
          %s170 = scalar_lea.sflag [#allocation3], %s169
          %s171 = sand.u32 %s49, 1
          %s172 = smul.addr %s171, 8
          %s173 = scalar_lea.vmem [#allocation2], %s172
          %175 = vsyncadd %s170, 0
          %s176 = smul.addr %s25, 2
          %s177 = sadd.s32 %s26, %s176
          %s178 = smul.addr %s177, 8
          %s179 = scalar_lea.hbm %s0, %s178
          %s181 = sshll.u32 %s179, 4
          %s182 = int_to_ptr.hbm [resolvable:$true] %s181
          %s183 = sshll.u32 %s173, 4
          %s184 = int_to_ptr.vmem [resolvable:$true] %s183
          %186 = dma.hbm_to_vmem [thread:$0]  %s182, 128, %s184, %s170
        $region20: #{tpu_custom_call.1} parent=15 // pred_fallthru
          _
        // Predicated region
        $region21: #{tpu_custom_call.1} parent=15 // pred_check
          %p187 = pneg %p85
        $region22: #{tpu_custom_call.1} parent=15 // pred_check_branch
          %189 = sbr.rel (%p187) target = $region24
        $region23: #{tpu_custom_call.1} parent=15 // pred_region
          %s190 = sand.u32 %s18, 1
          %s191 = scalar_lea.sflag [#allocation6], %s190
          %s192 = sand.u32 %s75, 1
          %s193 = smul.addr %s192, 128
          %s194 = scalar_lea.vmem [#allocation5], %s193
          %196 = vsyncadd %s191, 0
          %s197 = smul.addr %s27, 8
          %s198 = scalar_lea.hbm %s1, %s197
          %s199 = sshll.u32 %s198, 4
          %s200 = int_to_ptr.hbm [resolvable:$true] %s199
          %s201 = sshll.u32 %s194, 4
          %s202 = int_to_ptr.vmem [resolvable:$true] %s201
          %207 = dma.hbm_to_vmem [thread:$0]  %s200, 2048, %s202, %s191, 384, 128, 8
        $region24: #{tpu_custom_call.1} parent=15 // pred_fallthru
          _
        // Predicated region
        $region25: #{tpu_custom_call.1} parent=15 // pred_check
          %p208 = pneg %p111
        $region26: #{tpu_custom_call.1} parent=15 // pred_check_branch
          %210 = sbr.rel (%p208) target = $region28
        $region27: #{tpu_custom_call.1} parent=15 // pred_region
          %s211 = sand.u32 %s18, 1
          %s212 = scalar_lea.sflag [#allocation6], %s211
          %s213 = sand.u32 %s101, 1
          %s214 = scalar_lea.vmem [#allocation7], %s213
          %216 = vsyncadd %s212, 0
          %s217 = scalar_lea.hbm %s2, %s27
          %s219 = sshll.u32 %s217, 4
          %s220 = int_to_ptr.hbm [resolvable:$true] %s219
          %s221 = sshll.u32 %s214, 4
          %s222 = int_to_ptr.vmem [resolvable:$true] %s221
          %224 = dma.hbm_to_vmem [thread:$0]  %s220, 16, %s222, %s212
        $region28: #{tpu_custom_call.1} parent=15 // pred_fallthru
          _
      $region16: #{tpu_custom_call.1} parent=5 // pred_fallthru
        _
      %p225 = scmp.le.s32.totalorder 1, %s18
      %p226 = scmp.lt.s32.totalorder %s18, 13
      %p227 = pnand %p225, %p226
      %p228 = pneg %p227
      // Predicated region
      $region29: #{tpu_custom_call.1} parent=5 // pred_check
        _
      $region30: #{tpu_custom_call.1} parent=5 // pred_check_branch
        %230 = sbr.rel (%p227) target = $region32
      $region31: #{tpu_custom_call.1} parent=5 // pred_region
        %s231 = ssub.s32 %s18, 1
        %s232 = sand.u32 %s52, 1
        %s233 = scalar_lea.sflag [#allocation3], %s232
        %s234 = sand.u32 %s52, 1
        %s235 = smul.addr %s234, 8
        %s236 = scalar_lea.vmem [#allocation2], %s235
        // Predicated region
        $region33: #{tpu_custom_call.1} parent=31 // pred_check
          %p237 = pneg %p65
        $region34: #{tpu_custom_call.1} parent=31 // pred_check_branch
          %239 = sbr.rel (%p237) target = $region36
        $region35: #{tpu_custom_call.1} parent=31 // pred_region
          %241 = dma.done %s233, 128
        $region36: #{tpu_custom_call.1} parent=31 // pred_fallthru
          _
        %s242 = sand.u32 %s23, 1
        %s243 = scalar_lea.sflag [#allocation6], %s242
        %s244 = sand.u32 %s78, 1
        %s245 = smul.addr %s244, 128
        %s246 = scalar_lea.vmem [#allocation5], %s245
        // Predicated region
        $region37: #{tpu_custom_call.1} parent=31 // pred_check
          %p247 = pneg %p91
        $region38: #{tpu_custom_call.1} parent=31 // pred_check_branch
          %249 = sbr.rel (%p247) target = $region40
        $region39: #{tpu_custom_call.1} parent=31 // pred_region
          %251 = dma.done %s243, 2048
        $region40: #{tpu_custom_call.1} parent=31 // pred_fallthru
          _
        %s252 = sand.u32 %s23, 1
        %s253 = scalar_lea.sflag [#allocation6], %s252
        %s254 = sand.u32 %s104, 1
        %s255 = scalar_lea.vmem [#allocation7], %s254
        // Predicated region
        $region41: #{tpu_custom_call.1} parent=31 // pred_check
          %p256 = pneg %p117
        $region42: #{tpu_custom_call.1} parent=31 // pred_check_branch
          %258 = sbr.rel (%p256) target = $region44
        $region43: #{tpu_custom_call.1} parent=31 // pred_region
          %260 = dma.done %s253, 16
        $region44: #{tpu_custom_call.1} parent=31 // pred_fallthru
          _
        %s261 = sand.u32 %s52, 1
        %s262 = scalar_lea.sflag [#allocation3], %s261
        %s263 = sand.u32 %s52, 1
        %s264 = smul.addr %s263, 8
        %s265 = scalar_lea.vmem [#allocation2], %s264
        %p266 = pneg %p65
        %p267 = pneg %p62
        %s268 = sand.u32 %s23, 1
        %s269 = scalar_lea.sflag [#allocation6], %s268
        %s270 = sand.u32 %s78, 1
        %s271 = smul.addr %s270, 128
        %s272 = scalar_lea.vmem [#allocation5], %s271
        %p273 = pneg %p91
        %p274 = pneg %p88
        %s275 = sand.u32 %s23, 1
        %s276 = scalar_lea.sflag [#allocation6], %s275
        %s277 = sand.u32 %s104, 1
        %s278 = scalar_lea.vmem [#allocation7], %s277
        %p279 = pneg %p117
        %p280 = pneg %p114
        %p281 = pneg %p147
        %p282 = pneg %p144
        %s283 = sand.u32 %s134, 1
        %s284 = scalar_lea.sflag [#allocation4], %s283
        %s285 = sand.u32 %s134, 1
        %s286 = smul.addr %s285, 8
        %s287 = scalar_lea.vmem [#allocation8], %s286
        %v288 = vld [vmem:[%s236] sm:$0xff]
        %v289 = vld [vmem:[%s246] sm:$0xff]
        %v290 = vld [vmem:[%s246 + $0x8] sm:$0xff]
        %v291 = vld [vmem:[%s246 + $0x10] sm:$0xff]
        %v292 = vld [vmem:[%s246 + $0x18] sm:$0xff]
        %v293 = vld [vmem:[%s246 + $0x20] sm:$0xff]
        %v294 = vld [vmem:[%s246 + $0x28] sm:$0xff]
        %v295 = vld [vmem:[%s246 + $0x30] sm:$0xff]
        %v296 = vld [vmem:[%s246 + $0x38] sm:$0xff]
        %v297 = vld [vmem:[%s246 + $0x40] sm:$0xff]
        %v298 = vld [vmem:[%s246 + $0x48] sm:$0xff]
        %v299 = vld [vmem:[%s246 + $0x50] sm:$0xff]
        %v300 = vld [vmem:[%s246 + $0x58] sm:$0xff]
        %v301 = vld [vmem:[%s246 + $0x60] sm:$0xff]
        %v302 = vld [vmem:[%s246 + $0x68] sm:$0xff]
        %v303 = vld [vmem:[%s246 + $0x70] sm:$0xff]
        %v304 = vld [vmem:[%s246 + $0x78] sm:$0xff]
        %v305 = vld [vmem:[%s255] sm:$0x1]
        %v307 = vperm.slane %v305, 0
        %309 = vmatpush.msra.mxu0 %v304
        %310 = vmatpush.msra.mxu0 %v303
        %311 = vmatpush.msra.mxu0 %v302
        %312 = vmatpush.msra.mxu0 %v301
        %313 = vmatpush.msra.mxu0 %v300
        %314 = vmatpush.msra.mxu0 %v299
        %315 = vmatpush.msra.mxu0 %v298
        %316 = vmatpush.msra.mxu0 %v297
        %317 = vmatpush.msra.mxu0 %v296
        %318 = vmatpush.msra.mxu0 %v295
        %319 = vmatpush.msra.mxu0 %v294
        %320 = vmatpush.msra.mxu0 %v293
        %321 = vmatpush.msra.mxu0 %v292
        %322 = vmatpush.msra.mxu0 %v291
        %323 = vmatpush.msra.mxu0 %v290
        %324 = vmatpush.msra.mxu0 %v289
        %325 = vmatmul.f32.gmra.mxu0 %v288
        %v326 = vpop.f32.mrf.mxu0
        %v327 = vadd.f32 %v307, %v326
        %328 = vdwg.mxu0
        %329 = vst [vmem:[%s287] sm:$0xff] %v327
        %s330 = sand.u32 %s134, 1
        %s331 = scalar_lea.sflag [#allocation4], %s330
        %s332 = sand.u32 %s134, 1
        %s333 = smul.addr %s332, 8
        %s334 = scalar_lea.vmem [#allocation8], %s333
        // Predicated region
        $region45: #{tpu_custom_call.1} parent=31 // pred_check
          %p335 = pneg %p144
        $region46: #{tpu_custom_call.1} parent=31 // pred_check_branch
          %337 = sbr.rel (%p335) target = $region48
        $region47: #{tpu_custom_call.1} parent=31 // pred_region
          %339 = vsyncadd %s331, 0
          %s340 = smul.addr %s29, 3
          %s341 = sadd.s32 %s30, %s340
          %s342 = smul.addr %s28, 6
          %s343 = sadd.s32 %s341, %s342
          %s344 = smul.addr %s343, 8
          %s345 = scalar_lea.hbm %s3, %s344
          %s347 = sshll.u32 %s334, 4
          %s348 = int_to_ptr.vmem [resolvable:$true] %s347
          %s349 = sshll.u32 %s345, 4
          %s350 = int_to_ptr.hbm [resolvable:$true] %s349
          %352 = dma.vmem_to_hbm [thread:$0]  %s348, 128, %s350, %s331
        $region48: #{tpu_custom_call.1} parent=31 // pred_fallthru
          _
      $region32: #{tpu_custom_call.1} parent=5 // pred_fallthru
        _
      %p353 = scmp.le.s32.totalorder 2, %s18
      // Predicated region
      $region49: #{tpu_custom_call.1} parent=5 // pred_check
        %p354 = pneg %p353
      $region50: #{tpu_custom_call.1} parent=5 // pred_check_branch
        %356 = sbr.rel (%p354) target = $region52
      $region51: #{tpu_custom_call.1} parent=5 // pred_region
        %s357 = ssub.s32 %s18, 2
        // Predicated region
        $region53: #{tpu_custom_call.1} parent=51 // pred_check
          %p358 = pneg %p150
        $region54: #{tpu_custom_call.1} parent=51 // pred_check_branch
          %360 = sbr.rel (%p358) target = $region56
        $region55: #{tpu_custom_call.1} parent=51 // pred_region
          %s361 = sand.u32 %s135, 1
          %s362 = scalar_lea.sflag [#allocation4], %s361
          %s363 = sand.u32 %s135, 1
          %s364 = smul.addr %s363, 8
          %s365 = scalar_lea.vmem [#allocation8], %s364
          %367 = dma.done %s362, 128
        $region56: #{tpu_custom_call.1} parent=51 // pred_fallthru
          _
      $region52: #{tpu_custom_call.1} parent=5 // pred_fallthru
        _
    $region6: #{tpu_custom_call.1} parent=1 // loop_footer
      %s22 = sadd.s32 1, %s18
    $region7: #{tpu_custom_call.1} parent=1 // loop_footer_branch
      %17 = sbr.rel target = $region3
    $region8: #{tpu_custom_call.1} parent=1 // loop_exit
      _
    %368 = vsyncpa [#allocation3], 1
    %s369 = scalar_lea.sflag [#allocation3], 1
    %370 = vsyncpa %s369, 1
    %371 = vsyncpa [#allocation6], 1
    %s372 = scalar_lea.sflag [#allocation6], 1
    %373 = vsyncpa %s372, 1
    %374 = vsyncpa [#allocation4], 1
    %s375 = scalar_lea.sflag [#allocation4], 1
    %376 = vsyncpa %s375, 1

</llo_original>
